<compile_context>
chip_gen: v6e
topology: v6e:2x2x1
jax: 0.10.0
libtpu: 0.0.40
codegen_flags: <defaults>
</compile_context>

<pallas_src>
import functools
import math

import jax
import jax.numpy as jnp
from jax import lax
from jax.experimental import pallas as pl
from jax.experimental.pallas import tpu as pltpu

_LANE = 128
_SUBLANE = 8
_TARGET_BLOCK_BYTES = 2 << 20      # ~2 MiB of input per grid step
_SINGLE_PASS_MAX_BLOCK = 4 << 20   # max bytes for a full-B (B, 128) column block
_VMEM_LIMIT_BYTES = 32 * 1024 * 1024


def _round_up(a: int, b: int) -> int:
    return ((a + b - 1) // b) * b


def _acc_dtype(dtype):
    # TODO(synk): torch.sum accumulates integer inputs in int64; we accumulate
    # ints in int32 (floats in float32), which can differ for very large sums.
    if jnp.issubdtype(dtype, jnp.floating):
        return jnp.float32
    return jnp.int32


def _choose_tile_f(F: int, max_tile_f: int) -> int:
    """Lane-dense tile_f, kept small enough that F splits into >= 2 tiles."""
    f_pad = _round_up(F, _LANE)
    tile_f = min(max(_LANE, (max_tile_f // _LANE) * _LANE), f_pad)
    # Keep >= 2 F tiles when possible so the "parallel" F axis can be sharded
    # across both TensorCores on v7x.
    if tile_f == f_pad and f_pad >= 2 * _LANE:
        tile_f = ((f_pad // _LANE + 1) // 2) * _LANE
    return tile_f


def _sum_single_pass_kernel(x_ref, o_ref, *, acc_dtype):
    # Full B rows per block: one reduction, no scratch, no pl.when.
    o_ref[...] = jnp.sum(
        x_ref[...].astype(acc_dtype), axis=0, keepdims=True
    ).astype(o_ref.dtype)


def _sum_two_pass_kernel(x_ref, o_ref, acc_ref, *, b_rows, tile_b, acc_dtype):
    b = pl.program_id(1)  # reduction axis (last grid axis)

    @pl.when(b == 0)
    def _init():
        acc_ref[...] = jnp.zeros_like(acc_ref)

    x = x_ref[...].astype(acc_dtype)

    rem = b_rows % tile_b
    if rem:  # static: only emit the mask when B has a ragged tail
        # Pallas edge blocks are NOT guaranteed zero out-of-bounds; mask the
        # tail rows of the last B block before accumulating.
        valid = jnp.where(b == pl.num_programs(1) - 1, rem, tile_b)
        rows = lax.broadcasted_iota(jnp.int32, x.shape, 0)
        x = jnp.where(rows < valid, x, jnp.zeros_like(x))

    # Small (1, tile_f) accumulator: decouples VMEM scratch from tile_b.
    acc_ref[...] += jnp.sum(x, axis=0, keepdims=True)

    @pl.when(b == pl.num_programs(1) - 1)
    def _finalize():
        o_ref[...] = acc_ref[...].astype(o_ref.dtype)


def sum_vertically(
    x,
    *,
    small_input_fallback_bytes: int = 1 << 20,
    single_pass_max_block_bytes: int = _SINGLE_PASS_MAX_BLOCK,
):
    """Equivalent of torch.sum(x, 0).view(1, -1)."""
    B = x.shape[0]
    F = math.prod(x.shape[1:]) if x.ndim > 1 else 1
    x2d = x.reshape(B, F)
    itemsize = jnp.dtype(x.dtype).itemsize
    total_bytes = B * F * itemsize

    # Tiny-input fast path: the pallas_call would be pure fixed overhead.
    if total_bytes < small_input_fallback_bytes:
        return jnp.sum(x2d, axis=0).reshape(1, F)

    acc_dtype = _acc_dtype(x.dtype)
    cost = pl.CostEstimate(
        flops=B * F,
        transcendentals=0,
        bytes_accessed=B * F * itemsize + F * itemsize,
    )

    if B * _LANE * itemsize <= single_pass_max_block_bytes:
        # ---- single pass: block covers all of B, grid over F only ----
        max_tile_f = max(_LANE, _TARGET_BLOCK_BYTES // max(B * itemsize, 1))
        tile_f = _choose_tile_f(F, max_tile_f)
        f_tiles = pl.cdiv(F, tile_f)

        out = pl.pallas_call(
            functools.partial(_sum_single_pass_kernel, acc_dtype=acc_dtype),
            out_shape=jax.ShapeDtypeStruct((1, F), x.dtype),
            grid=(f_tiles,),
            in_specs=[pl.BlockSpec((B, tile_f), lambda j: (0, j))],
            out_specs=pl.BlockSpec((1, tile_f), lambda j: (0, j)),
            compiler_params=pltpu.CompilerParams(
                dimension_semantics=("parallel",),
                vmem_limit_bytes=_VMEM_LIMIT_BYTES,
            ),
            cost_estimate=cost,
        )(x2d)
        return out

    # ---- two pass: grid over (F_tiles, B_tiles), B reduction axis last ----
    tile_f = _choose_tile_f(F, 1024)
    tile_b = max(32, (_TARGET_BLOCK_BYTES // max(tile_f * itemsize, 1)) // 32 * 32)
    tile_b = min(tile_b, _round_up(B, 32))
    f_tiles = pl.cdiv(F, tile_f)
    b_tiles = pl.cdiv(B, tile_b)

    out = pl.pallas_call(
        functools.partial(
            _sum_two_pass_kernel, b_rows=B, tile_b=tile_b, acc_dtype=acc_dtype
        ),
        out_shape=jax.ShapeDtypeStruct((1, F), x.dtype),
        grid=(f_tiles, b_tiles),
        in_specs=[pl.BlockSpec((tile_b, tile_f), lambda j, b: (b, j))],
        out_specs=pl.BlockSpec((1, tile_f), lambda j, b: (0, j)),
        scratch_shapes=[pltpu.VMEM((1, tile_f), acc_dtype)],
        compiler_params=pltpu.CompilerParams(
            dimension_semantics=("parallel", "arbitrary"),
            vmem_limit_bytes=_VMEM_LIMIT_BYTES,
        ),
        cost_estimate=cost,
    )(x2d)
    return out


if __name__ == "__main__":
    key = jax.random.PRNGKey(0)
    k0, k1 = jax.random.split(key)

    # Small shapes consistent with the module: batch=16, channels=4, hidden=64.
    x = jax.random.normal(k0, (16, 4, 64), dtype=jnp.float32)

    # 1) Pallas single-pass path (fallback disabled so the kernel actually runs).
    out = jax.block_until_ready(sum_vertically(x, small_input_fallback_bytes=0))
    ref = jnp.sum(x, axis=0).reshape(1, -1)
    assert out.shape == (1, 4 * 64), out.shape
    assert jnp.allclose(out, ref, atol=1e-5, rtol=1e-5)

    # 2) Ragged shapes (F not a multiple of 128, B not a multiple of 32),
    #    single-pass path with a partial edge F block.
    x2 = jax.random.normal(k1, (20, 5, 60), dtype=jnp.float32)
    out2 = jax.block_until_ready(sum_vertically(x2, small_input_fallback_bytes=0))
    ref2 = jnp.sum(x2, axis=0).reshape(1, -1)
    assert out2.shape == (1, 5 * 60), out2.shape
    assert jnp.allclose(out2, ref2, atol=1e-5, rtol=1e-5)

    # 3) Force the two-pass (grid-reduction) kernel to exercise the in-kernel
    #    B-tail masking and accumulator init/finalize.
    out3 = jax.block_until_ready(
        sum_vertically(
            x2, small_input_fallback_bytes=0, single_pass_max_block_bytes=0
        )
    )
    assert jnp.allclose(out3, ref2, atol=1e-5, rtol=1e-5)

    # 4) Tiny-input fast path (pure jnp) agrees too.
    out4 = jax.block_until_ready(sum_vertically(x))
    assert jnp.allclose(out4, ref, atol=1e-5, rtol=1e-5)

    print("KERNEL_OK")
</pallas_src>

<mosaic_0001>
module attributes {stable_mosaic.version = 11 : i64} {
  func.func @_sum_single_pass_kernel(%arg0: i32, %arg1: memref<16x128xf32, #tpu.memory_space<vmem>>, %arg2: memref<1x128xf32, #tpu.memory_space<vmem>>) attributes {dimension_semantics = [#tpu.dimension_semantics<parallel>], iteration_bounds = array<i64: 2>, scalar_prefetch = 0 : i64, scratch_operands = 0 : i64, tpu.core_type = #tpu.core_type<tc>, window_params = [{transform_indices = @transform_0, window_bounds = array<i64: 16, 128>}, {transform_indices = @transform_1, window_bounds = array<i64: 1, 128>}]} {
    %c0 = arith.constant 0 : index
    %c0_0 = arith.constant 0 : index
    %0 = vector.load %arg1[%c0, %c0_0] : memref<16x128xf32, #tpu.memory_space<vmem>>, vector<16x128xf32>
    %cst = arith.constant dense<0.000000e+00> : vector<128xf32>
    %1 = vector.multi_reduction <add>, %0, %cst [0] : vector<16x128xf32> to vector<128xf32>
    %2 = vector.shape_cast %1 : vector<128xf32> to vector<1x128xf32>
    %c0_1 = arith.constant 0 : index
    %c0_2 = arith.constant 0 : index
    %3 = vector.load %arg2[%c0_1, %c0_2] : memref<1x128xf32, #tpu.memory_space<vmem>>, vector<1x128xf32>
    tpu.vector_store %arg2[%c0_1, %c0_2], %2 {strides = array<i32>} : memref<1x128xf32, #tpu.memory_space<vmem>>, vector<1x128xf32>,
    return
  }
  func.func @transform_0(%arg0: i32) -> (i32, i32) {
    %c0_i32 = arith.constant 0 : i32
    %c0_i32_0 = arith.constant 0 : i32
    return %c0_i32, %arg0 : i32, i32
  }
  func.func @transform_1(%arg0: i32) -> (i32, i32) {
    %c0_i32 = arith.constant 0 : i32
    %c0_i32_0 = arith.constant 0 : i32
    return %c0_i32, %arg0 : i32, i32
  }
}

</mosaic_0001>

<llo_original>
// kernel: tpu_custom_call.1
$region0: #{tpu_custom_call.1}
  #allocation0 [shape = 'u32[]', space=smem, size = 0x4, offset = 0x4, fixed_abs, tag = 'smem constant byte address 0x4 - core index']
  #allocation1 [shape = 'u32[144,128]{1,0:T(1,128)}', space=vmem, size = 0x12000, scoped, tag = 'internal scratch']
  %s0 = inlined_call_operand.hbm [shape: f32[16,256], index: 0, kind: input, shape index: {}]
  %s1 = inlined_call_operand.hbm [shape: f32[1,256], index: 1, kind: output, shape index: {}]
  %s2 = sld [smem:[#allocation0]]
  $region41: #{tpu_custom_call.1} parent=0
    _
  %s4 = ssub.s32 1, %s2
  %s5 = scalar_select 0, %s4, %s2
  $region1: #{tpu_custom_call.1} parent=0
    #allocation2 [shape = 'u8[16384]{0}', space=vmem, size = 0x4000, scoped, tag = 'input window, operand 0']
    #allocation3 [shape = 's32[2]{0}', space=sflag, size = 0x8, scoped, tag = 'scoped memory for tpu_custom_call.1']
    #allocation4 [shape = 's32[2]{0}', space=sflag, size = 0x8, scoped, tag = 'scoped memory for tpu_custom_call.1']
    #allocation5 [shape = 'u8[1024]{0}', space=vmem, size = 0x400, scoped, tag = 'output window, operand 0']
    %6 = vsyncpa [#allocation3], 0
    %s7 = scalar_lea.sflag [#allocation3], 1
    %8 = vsyncpa %s7, 0
    %9 = vsyncpa [#allocation4], 0
    %s10 = scalar_lea.sflag [#allocation4], 1
    %11 = vsyncpa %s10, 0
    loop: start=0, step=1, limit=4
    $region2: #{tpu_custom_call.1} parent=1 // loop_pre_header
      _
    $region3: #{tpu_custom_call.1} parent=1 // loop_header
      %s13 = sphi 0, %s17
      %p14 = scmp.ge.s32.totalorder %s13, 4
      %s23 = sphi 0, %s25
      %s26 = sphi 0, %s23
      %s27 = sphi 0, %s26
      %s43 = sphi 0, %s27
      %s49 = sphi 0, %s51
      %s52 = sphi 0, %s49
      %s53 = sphi 0, %s52
      %s69 = sphi 0, %s53
    $region4: #{tpu_custom_call.1} parent=1 // loop_header_branch
      %16 = sbr.rel (%p14) target = $region8
    $region5: #{tpu_custom_call.1} parent=1 // loop_body
      %s18 = ssub.s32 %s13, 1
      %s19 = ssub.s32 %s13, 2
      %s20 = sadd.s32 %s13, 1
      %s21 = ssub.s32 %s13, %s20
      %p22 = scmp.eq.s32.totalorder %s21, 0
      %s24 = sadd.s32 %s23, 1
      %s25 = scalar_select %p22, %s23, %s24
      %p28 = pneg %p22
      %p29 = scmp.eq.s32.totalorder %s13, 1
      %p30 = por %p28, %p29
      %p31 = scmp.ne.s32.totalorder %s23, %s26
      %p32 = scmp.eq.s32.totalorder %s13, 0
      %p33 = por %p31, %p32
      %p34 = scmp.ne.s32.totalorder %s23, %s26
      %p35 = scmp.eq.s32.totalorder %s18, 1
      %p36 = por %p34, %p35
      %p37 = scmp.ne.s32.totalorder %s26, %s27
      %p38 = scmp.eq.s32.totalorder %s18, 0
      %p39 = por %p37, %p38
      %p40 = scmp.ne.s32.totalorder %s26, %s27
      %p41 = scmp.eq.s32.totalorder %s19, 1
      %p42 = por %p40, %p41
      %p44 = scmp.ne.s32.totalorder %s27, %s43
      %p45 = scmp.eq.s32.totalorder %s19, 0
      %p46 = por %p44, %p45
      %s47 = ssub.s32 %s13, %s20
      %p48 = scmp.eq.s32.totalorder %s47, 0
      %s50 = sadd.s32 %s49, 1
      %s51 = scalar_select %p48, %s49, %s50
      %p54 = pneg %p48
      %p55 = scmp.eq.s32.totalorder %s13, 1
      %p56 = por %p54, %p55
      %p57 = scmp.ne.s32.totalorder %s49, %s52
      %p58 = scmp.eq.s32.totalorder %s13, 0
      %p59 = por %p57, %p58
      %p60 = scmp.ne.s32.totalorder %s49, %s52
      %p61 = scmp.eq.s32.totalorder %s18, 1
      %p62 = por %p60, %p61
      %p63 = scmp.ne.s32.totalorder %s52, %s53
      %p64 = scmp.eq.s32.totalorder %s18, 0
      %p65 = por %p63, %p64
      %p66 = scmp.ne.s32.totalorder %s52, %s53
      %p67 = scmp.eq.s32.totalorder %s19, 1
      %p68 = por %p66, %p67
      %p70 = scmp.ne.s32.totalorder %s53, %s69
      %p71 = scmp.eq.s32.totalorder %s19, 0
      %p72 = por %p70, %p71
      %p73 = scmp.le.s32.totalorder 1, %s13
      %p74 = scmp.lt.s32.totalorder %s13, 3
      %p75 = pnand %p73, %p74
      %p76 = pneg %p75
      // Predicated region
      $region9: #{tpu_custom_call.1} parent=5 // pred_check
        _
      $region10: #{tpu_custom_call.1} parent=5 // pred_check_branch
        %78 = sbr.rel (%p75) target = $region12
      $region11: #{tpu_custom_call.1} parent=5 // pred_region
        %s79 = ssub.s32 %s13, 1
      $region12: #{tpu_custom_call.1} parent=5 // pred_fallthru
        _
      %p80 = scmp.lt.s32.totalorder %s13, 2
      // Predicated region
      $region13: #{tpu_custom_call.1} parent=5 // pred_check
        %p81 = pneg %p80
      $region14: #{tpu_custom_call.1} parent=5 // pred_check_branch
        %83 = sbr.rel (%p81) target = $region16
      $region15: #{tpu_custom_call.1} parent=5 // pred_region
        // Predicated region
        $region17: #{tpu_custom_call.1} parent=15 // pred_check
          %p84 = pneg %p33
        $region18: #{tpu_custom_call.1} parent=15 // pred_check_branch
          %86 = sbr.rel (%p84) target = $region20
        $region19: #{tpu_custom_call.1} parent=15 // pred_region
          %s87 = sand.u32 %s23, 1
          %s88 = scalar_lea.sflag [#allocation3], %s87
          %s89 = sand.u32 %s23, 1
          %s90 = smul.addr %s89, 16
          %s91 = scalar_lea.vmem [#allocation2], %s90
          %s93 = ssub.s32 256, 256
          %94 = vsyncadd %s88, %s93
          %s95 = smul.addr %s13, 128
          %s96 = scalar_lea.hbm %s0, %s95
          %s97 = sshll.u32 %s91, 4
          %s98 = int_to_ptr.vmem [resolvable:$true] %s97
          %103 = dma.hbm_to_vmem [thread:$0]  %s96, 256, %s98, %s88, 256, 128, 8
        $region20: #{tpu_custom_call.1} parent=15 // pred_fallthru
          _
      $region16: #{tpu_custom_call.1} parent=5 // pred_fallthru
        _
      %p104 = scmp.le.s32.totalorder 1, %s13
      %p105 = scmp.lt.s32.totalorder %s13, 3
      %p106 = pnand %p104, %p105
      %p107 = pneg %p106
      // Predicated region
      $region21: #{tpu_custom_call.1} parent=5 // pred_check
        _
      $region22: #{tpu_custom_call.1} parent=5 // pred_check_branch
        %109 = sbr.rel (%p106) target = $region24
      $region23: #{tpu_custom_call.1} parent=5 // pred_region
        %s110 = ssub.s32 %s13, 1
        %s111 = sand.u32 %s26, 1
        %s112 = scalar_lea.sflag [#allocation3], %s111
        %s113 = sand.u32 %s26, 1
        %s114 = smul.addr %s113, 16
        %s115 = scalar_lea.vmem [#allocation2], %s114
        // Predicated region
        $region25: #{tpu_custom_call.1} parent=23 // pred_check
          %p116 = pneg %p39
        $region26: #{tpu_custom_call.1} parent=23 // pred_check_branch
          %118 = sbr.rel (%p116) target = $region28
        $region27: #{tpu_custom_call.1} parent=23 // pred_region
          %119 = dma.done %s112, 256
        $region28: #{tpu_custom_call.1} parent=23 // pred_fallthru
          _
        %s120 = sand.u32 %s26, 1
        %s121 = scalar_lea.sflag [#allocation3], %s120
        %s122 = sand.u32 %s26, 1
        %s123 = smul.addr %s122, 16
        %s124 = scalar_lea.vmem [#allocation2], %s123
        %p125 = pneg %p39
        %p126 = pneg %p36
        %p127 = pneg %p65
        %p128 = pneg %p62
        %s129 = sand.u32 %s52, 1
        %s130 = scalar_lea.sflag [#allocation4], %s129
        %s131 = sand.u32 %s52, 1
        %s132 = scalar_lea.vmem [#allocation5], %s131
        %v133 = vld [vmem:[%s115] sm:$0xff]
        %v134 = vld [vmem:[%s115 + $0x8] sm:$0xff]
        %v135 = vadd.f32 %v133, %v134
        %v136 = vrot.slane %v135, 4
        %v137 = vadd.f32 %v135, %v136
        %v138 = vrot.slane %v137, 2
        %v139 = vadd.f32 %v137, %v138
        %v140 = vrot.slane %v139, 1
        %v141 = vadd.f32 %v139, %v140
        %142 = vst [vmem:[%s132] sm:$0x1] %v141
        %s143 = sand.u32 %s52, 1
        %s144 = scalar_lea.sflag [#allocation4], %s143
        %s145 = sand.u32 %s52, 1
        %s146 = scalar_lea.vmem [#allocation5], %s145
        // Predicated region
        $region29: #{tpu_custom_call.1} parent=23 // pred_check
          %p147 = pneg %p62
        $region30: #{tpu_custom_call.1} parent=23 // pred_check_branch
          %149 = sbr.rel (%p147) target = $region32
        $region31: #{tpu_custom_call.1} parent=23 // pred_region
          %s151 = ssub.s32 16, 16
          %152 = vsyncadd %s144, %s151
          %s153 = smul.addr %s18, 16
          %s154 = scalar_lea.hbm %s1, %s153
          %s156 = sshll.u32 %s146, 4
          %s157 = int_to_ptr.vmem [resolvable:$true] %s156
          %159 = dma.vmem_to_hbm [thread:$0]  %s157, 16, %s154, %s144
        $region32: #{tpu_custom_call.1} parent=23 // pred_fallthru
          _
      $region24: #{tpu_custom_call.1} parent=5 // pred_fallthru
        _
      %p160 = scmp.le.s32.totalorder 2, %s13
      // Predicated region
      $region33: #{tpu_custom_call.1} parent=5 // pred_check
        %p161 = pneg %p160
      $region34: #{tpu_custom_call.1} parent=5 // pred_check_branch
        %163 = sbr.rel (%p161) target = $region36
      $region35: #{tpu_custom_call.1} parent=5 // pred_region
        %s164 = ssub.s32 %s13, 2
        // Predicated region
        $region37: #{tpu_custom_call.1} parent=35 // pred_check
          %p165 = pneg %p68
        $region38: #{tpu_custom_call.1} parent=35 // pred_check_branch
          %167 = sbr.rel (%p165) target = $region40
        $region39: #{tpu_custom_call.1} parent=35 // pred_region
          %s168 = sand.u32 %s53, 1
          %s169 = scalar_lea.sflag [#allocation4], %s168
          %s170 = sand.u32 %s53, 1
          %s171 = scalar_lea.vmem [#allocation5], %s170
          %172 = dma.done %s169, 16
        $region40: #{tpu_custom_call.1} parent=35 // pred_fallthru
          _
      $region36: #{tpu_custom_call.1} parent=5 // pred_fallthru
        _
    $region6: #{tpu_custom_call.1} parent=1 // loop_footer
      %s17 = sadd.s32 1, %s13
    $region7: #{tpu_custom_call.1} parent=1 // loop_footer_branch
      %12 = sbr.rel target = $region3
    $region8: #{tpu_custom_call.1} parent=1 // loop_exit
      _
    %173 = vsyncpa [#allocation3], 1
    %s174 = scalar_lea.sflag [#allocation3], 1
    %175 = vsyncpa %s174, 1
    %176 = vsyncpa [#allocation4], 1
    %s177 = scalar_lea.sflag [#allocation4], 1
    %178 = vsyncpa %s177, 1

</llo_original>
